<compile_context>
chip_gen: v5e
topology: v5e:2x2
jax: 0.10.0
libtpu: 0.0.40
codegen_flags: <defaults>
</compile_context>

<pallas_src>
import jax
import jax.numpy as jnp
from jax import lax
from jax.experimental import pallas as pl
from jax.experimental.pallas import tpu as pltpu


# ---------------------------------------------------------------------------
# Phase 1: batched feature extraction
#   stem -> ReLU -> (cnn_lc ∘ W_ih) folded -> gates_x  (rows = (b, t) order)
# ---------------------------------------------------------------------------
def feature_kernel(x_ref,        # (TM, DHW)       flattened volumes, bf16
                   w_stem_ref,   # (DHW, 512)      stand-in resnet_3d stem, bf16
                   b_stem_ref,   # (1, 512)        f32
                   w_fold_ref,   # (512, 4*hidden) W_lc @ W_ih, bf16
                   bias_ref,     # (1, 4*hidden)   b_lc @ W_ih + biav, f32
                   gx_ref):      # (TM, 4*hidden)  f32, lane-dense (128 lanes)
    feat = (jnp.dot(x_ref[...], w_stem_ref[...],
                    preferred_element_type=jnp.float32)
            + b_stem_ref[...])
    # cnn_lc: Dropout(eval) -> ReLU -> Linear(512,32), folded with @ W_ih.
    act = jnp.maximum(feat, 0.0).astype(w_fold_ref.dtype)
    gx_ref[...] = (jnp.dot(act, w_fold_ref[...],
                           preferred_element_type=jnp.float32)
                   + bias_ref[...])


# ---------------------------------------------------------------------------
# Phase 2: LSTM recurrence over time chunks + tail on the last hidden state
# ---------------------------------------------------------------------------
def lstm_tail_kernel(gx_ref,      # (T_CHUNK, bs_pad, 4*hidden)  f32
                     w_hh_ref,    # (hidden, 4*hidden)           bf16
                     w_tail_ref,  # (hidden, OUT_PAD)            f32, lane-padded
                     b_tail_ref,  # (1, OUT_PAD)                 f32
                     out_ref,     # (bs_pad, OUT_PAD)            f32
                     h_scr,       # VMEM (bs_pad, hidden)        f32
                     c_scr):      # VMEM (bs_pad, hidden)        f32
    chunk = pl.program_id(0)
    hidden = h_scr.shape[1]
    t_chunk = gx_ref.shape[0]

    # init_states is None -> zero h/c before the first timestep
    @pl.when(chunk == 0)
    def _():
        h_scr[...] = jnp.zeros_like(h_scr)
        c_scr[...] = jnp.zeros_like(c_scr)

    w_hh = w_hh_ref[...]   # hoisted out of the time loop

    def step(t, carry):
        h, c = carry
        # biav and b_lc @ W_ih are already folded into gates_x.
        gates = gx_ref[t] + jnp.dot(h.astype(w_hh.dtype), w_hh,
                                    preferred_element_type=jnp.float32)
        # Two full-width EUP pushes over the (bs_pad, 4*hidden) tile, then
        # slice — gate order f, i, o, g as in the reference torch.chunk.
        sig = jax.nn.sigmoid(gates)
        th = jnp.tanh(gates)
        f_t = sig[:, 0 * hidden:1 * hidden]
        i_t = sig[:, 1 * hidden:2 * hidden]
        o_t = sig[:, 2 * hidden:3 * hidden]
        g_t = th[:, 3 * hidden:4 * hidden]
        c = f_t * c + i_t * g_t
        h = o_t * jnp.tanh(c)
        return h, c

    h, c = lax.fori_loop(0, t_chunk, step, (h_scr[...], c_scr[...]),
                         unroll=True)
    h_scr[...] = h
    c_scr[...] = c

    # tail: Dropout(eval) -> ReLU -> Linear(hidden, 2) on the LAST h, written
    # lane-dense into a 128-wide slab (sliced back to 2 in the wrapper).
    @pl.when(chunk == pl.num_programs(0) - 1)
    def _():
        out_ref[...] = (jnp.dot(jnp.maximum(h, 0.0), w_tail_ref[...],
                                preferred_element_type=jnp.float32)
                        + b_tail_ref[...])


# ---------------------------------------------------------------------------
# Wrapper
# ---------------------------------------------------------------------------
def _round_up(n, m):
    return (n + m - 1) // m * m


def _divisor_leq(n, cap):
    cap = int(max(1, min(n, cap)))
    for d in range(cap, 0, -1):
        if n % d == 0:
            return d
    return 1


def _choose_tm(m_pad, cap_rows):
    """Largest row tile dividing m_pad, <= cap_rows, preferring an even grid
    (>=2 steps) so v7x's two TensorCores both get work."""
    cap = max(8, min(m_pad, int(cap_rows)))
    cap = (cap // 8) * 8
    best = None
    for tm in range(cap, 7, -8):
        if m_pad % tm == 0:
            if best is None:
                best = tm
            n = m_pad // tm
            if n >= 2 and n % 2 == 0:
                return tm
    return best if best is not None else 8


def maru_l0_forward(x, params, *, t_chunk=32, matmul_dtype=jnp.bfloat16):
    """x: (bs, seq, D, H, W) float32 -> (bs, 2) float32."""
    bs, seq, D, H, W = x.shape
    dhw = D * H * W
    hidden = params["W_hh"].shape[0]
    gate_dim = 4 * hidden
    out_dim = params["W_tail"].shape[1]

    bs_pad = _round_up(bs, 8)           # sublane groups, only for phase 2
    out_pad = _round_up(out_dim, 128)   # lane-dense output slab

    # ---- parameter prep ----------------------------------------------------
    w_stem = params["W_stem"].astype(matmul_dtype)
    b_stem = params["b_stem"].reshape(1, -1).astype(jnp.float32)
    # Fold cnn_lc's Linear with the LSTM input projection (exact):
    #   x_t @ W_ih = (relu(feat) @ W_lc + b_lc) @ W_ih
    #             = relu(feat) @ (W_lc @ W_ih) + b_lc @ W_ih
    w_fold = jnp.dot(params["W_lc"].astype(jnp.float32),
                     params["W_ih"].astype(jnp.float32)).astype(matmul_dtype)
    bias_fold = (jnp.dot(params["b_lc"].reshape(1, -1).astype(jnp.float32),
                         params["W_ih"].astype(jnp.float32))
                 + params["biav"].reshape(1, -1).astype(jnp.float32))

    w_hh = params["W_hh"].astype(matmul_dtype)
    w_tail = jnp.zeros((hidden, out_pad), jnp.float32).at[:, :out_dim].set(
        params["W_tail"].astype(jnp.float32))
    b_tail = jnp.zeros((1, out_pad), jnp.float32).at[:, :out_dim].set(
        params["b_tail"].reshape(1, -1).astype(jnp.float32))

    # ---- phase-1 input: free-view reshape + bf16 cast, NO transpose/pad ----
    m = bs * seq
    m_pad = _round_up(m, 8)
    x_flat = x.reshape(m, dhw).astype(matmul_dtype)
    if m_pad != m:
        x_flat = jnp.pad(x_flat, ((0, m_pad - m), (0, 0)))

    # ---- generation-aware VMEM budget / tile sizing ------------------------
    try:
        vmem_phys = pltpu.get_tpu_info().vmem_capacity_bytes
    except Exception:
        vmem_phys = 64 << 20
    vmem_limit = int(min(vmem_phys * 0.7, 100 << 20))
    bpe = jnp.dtype(matmul_dtype).itemsize
    fixed_bytes = (dhw * 512 * bpe + 512 * gate_dim * bpe
                   + 512 * 4 + gate_dim * 4)                  # weights + biases
    per_row = (2 * dhw * bpe                 # x tile, double-buffered
               + 512 * 4 + 512 * bpe        # feat f32 + act bf16 intermediates
               + 2 * gate_dim * 4)          # gates_x output, double-buffered
    headroom = 2 << 20
    cap_rows = max(8, (vmem_limit - fixed_bytes - headroom) // per_row)
    tm = _choose_tm(m_pad, cap_rows)

    full2d = lambda a: pl.BlockSpec(a.shape, lambda i: (0, 0))

    cost = pl.CostEstimate(
        flops=2 * m_pad * dhw * 512 + 2 * m_pad * 512 * gate_dim,
        transcendentals=0,
        bytes_accessed=(m_pad * dhw * bpe + dhw * 512 * bpe
                        + 512 * gate_dim * bpe + m_pad * gate_dim * 4))

    gx_flat = pl.pallas_call(
        feature_kernel,
        out_shape=jax.ShapeDtypeStruct((m_pad, gate_dim), jnp.float32),
        grid_spec=pltpu.PrefetchScalarGridSpec(
            num_scalar_prefetch=0,
            grid=(m_pad // tm,),
            in_specs=[pl.BlockSpec((tm, dhw), lambda i: (i, 0)),
                      full2d(w_stem), full2d(b_stem),
                      full2d(w_fold), full2d(bias_fold)],
            out_specs=pl.BlockSpec((tm, gate_dim), lambda i: (i, 0)),
        ),
        compiler_params=pltpu.CompilerParams(
            dimension_semantics=("parallel",),   # shards across TCs on v7x
            vmem_limit_bytes=vmem_limit),
        cost_estimate=cost,
    )(x_flat, w_stem, b_stem, w_fold, bias_fold)

    # ---- tiny layout plumbing on gates_x only ------------------------------
    # (bs*seq, 4*hidden) -> time-major (seq, bs_pad, 4*hidden)
    gx = gx_flat[:m].reshape(bs, seq, gate_dim)
    gx = jnp.transpose(gx, (1, 0, 2))
    if bs_pad != bs:
        gx = jnp.pad(gx, ((0, 0), (0, bs_pad - bs), (0, 0)))

    # ---- phase 2: LSTM recurrence + tail, serial over time chunks ----------
    tc = _divisor_leq(seq, t_chunk)

    out_padded = pl.pallas_call(
        lstm_tail_kernel,
        out_shape=jax.ShapeDtypeStruct((bs_pad, out_pad), jnp.float32),
        grid_spec=pltpu.PrefetchScalarGridSpec(
            num_scalar_prefetch=0,
            grid=(seq // tc,),
            in_specs=[pl.BlockSpec((tc, bs_pad, gate_dim),
                                   lambda c: (c, 0, 0)),
                      pl.BlockSpec(w_hh.shape, lambda c: (0, 0)),
                      pl.BlockSpec(w_tail.shape, lambda c: (0, 0)),
                      pl.BlockSpec(b_tail.shape, lambda c: (0, 0))],
            out_specs=pl.BlockSpec((bs_pad, out_pad), lambda c: (0, 0)),
            scratch_shapes=[pltpu.VMEM((bs_pad, hidden), jnp.float32),
                            pltpu.VMEM((bs_pad, hidden), jnp.float32)],
        ),
        compiler_params=pltpu.CompilerParams(
            dimension_semantics=("arbitrary",)),  # time recurrence is serial
    )(gx, w_hh, w_tail, b_tail)

    return out_padded[:bs, :out_dim]


def init_params(key, dhw, rnn_input=32, rnn_hidden=32):
    ks = jax.random.split(key, 6)
    kaiming = lambda k, shape: (jax.random.normal(k, shape, jnp.float32)
                                * jnp.sqrt(2.0 / shape[0]))
    return {
        # stand-in resnet_3d stem (flattened volume -> 512 features)
        "W_stem": kaiming(ks[0], (dhw, 512)),
        "b_stem": jnp.zeros((512,), jnp.float32),
        # cnn_lc Linear(512, 32)
        "W_lc": kaiming(ks[1], (512, rnn_input)),
        "b_lc": jnp.zeros((rnn_input,), jnp.float32),
        # LSTM params (kaiming / orthogonal / zeros, as in init_weights)
        "W_ih": kaiming(ks[2], (rnn_input, rnn_hidden * 4)),
        "W_hh": jax.nn.initializers.orthogonal()(
            ks[3], (rnn_hidden, rnn_hidden * 4), jnp.float32),
        "biav": jnp.zeros((rnn_hidden * 4,), jnp.float32),
        # tail Linear(hidden, 2)
        "W_tail": kaiming(ks[4], (rnn_hidden, 2)),
        "b_tail": jnp.zeros((2,), jnp.float32),
    }


if __name__ == "__main__":
    key = jax.random.PRNGKey(0)
    k_x, k_p = jax.random.split(key)

    bs, seq, D, H, W = 2, 8, 4, 8, 8           # small video: (2, 8, 4, 8, 8)
    x = jax.random.normal(k_x, (bs, seq, D, H, W), jnp.float32)
    params = init_params(k_p, dhw=D * H * W, rnn_input=32, rnn_hidden=32)

    out = maru_l0_forward(x, params)
    jax.block_until_ready(out)
    assert out.shape == (bs, 2) and out.dtype == jnp.float32
    assert bool(jnp.all(jnp.isfinite(out)))
    print("KERNEL_OK")
</pallas_src>

<mosaic_0001>
module attributes {stable_mosaic.version = 11 : i64} {
  func.func @feature_kernel(%arg0: i32, %arg1: memref<8x256xbf16, #tpu.memory_space<vmem>>, %arg2: memref<256x512xbf16, #tpu.memory_space<vmem>>, %arg3: memref<1x512xf32, #tpu.memory_space<vmem>>, %arg4: memref<512x128xbf16, #tpu.memory_space<vmem>>, %arg5: memref<1x128xf32, #tpu.memory_space<vmem>>, %arg6: memref<8x128xf32, #tpu.memory_space<vmem>>) attributes {dimension_semantics = [#tpu.dimension_semantics<parallel>], iteration_bounds = array<i64: 2>, scalar_prefetch = 0 : i64, scratch_operands = 0 : i64, tpu.core_type = #tpu.core_type<tc>, window_params = [{transform_indices = @transform_0, window_bounds = array<i64: 8, 256>}, {pipeline_mode = #tpu.pipeline_mode<synchronous>, transform_indices = @transform_1, window_bounds = array<i64: 256, 512>}, {pipeline_mode = #tpu.pipeline_mode<synchronous>, transform_indices = @transform_2, window_bounds = array<i64: 1, 512>}, {pipeline_mode = #tpu.pipeline_mode<synchronous>, transform_indices = @transform_3, window_bounds = array<i64: 512, 128>}, {pipeline_mode = #tpu.pipeline_mode<synchronous>, transform_indices = @transform_4, window_bounds = array<i64: 1, 128>}, {transform_indices = @transform_5, window_bounds = array<i64: 8, 128>}]} {
    %c0 = arith.constant 0 : index
    %c0_0 = arith.constant 0 : index
    %0 = vector.load %arg1[%c0, %c0_0] : memref<8x256xbf16, #tpu.memory_space<vmem>>, vector<8x256xbf16>
    %c0_1 = arith.constant 0 : index
    %c0_2 = arith.constant 0 : index
    %1 = vector.load %arg2[%c0_1, %c0_2] : memref<256x512xbf16, #tpu.memory_space<vmem>>, vector<256x512xbf16>
    %cst = arith.constant dense<0.000000e+00> : vector<8x512xf32>
    %2 = tpu.matmul %0, %1, %cst {dimension_numbers = #tpu.dot_dimension_numbers<[1], [0], [0], [1], [0, 0, 1, 1], [], []>} : vector<8x256xbf16>, vector<256x512xbf16>, vector<8x512xf32> -> vector<8x512xf32>
    %c0_3 = arith.constant 0 : index
    %c0_4 = arith.constant 0 : index
    %3 = vector.load %arg3[%c0_3, %c0_4] : memref<1x512xf32, #tpu.memory_space<vmem>>, vector<1x512xf32>
    %4 = vector.broadcast %3 : vector<1x512xf32> to vector<8x512xf32>
    %5 = arith.addf %2, %4 : vector<8x512xf32>
    %cst_5 = arith.constant 0.000000e+00 : f32
    %6 = vector.broadcast %cst_5 : f32 to vector<8x512xf32>
    %7 = arith.maximumf %5, %6 : vector<8x512xf32>
    %8 = arith.truncf %7 : vector<8x512xf32> to vector<8x512xbf16>
    %c0_6 = arith.constant 0 : index
    %c0_7 = arith.constant 0 : index
    %9 = vector.load %arg4[%c0_6, %c0_7] : memref<512x128xbf16, #tpu.memory_space<vmem>>, vector<512x128xbf16>
    %cst_8 = arith.constant dense<0.000000e+00> : vector<8x128xf32>
    %10 = tpu.matmul %8, %9, %cst_8 {dimension_numbers = #tpu.dot_dimension_numbers<[1], [0], [0], [1], [0, 0, 1, 1], [], []>} : vector<8x512xbf16>, vector<512x128xbf16>, vector<8x128xf32> -> vector<8x128xf32>
    %c0_9 = arith.constant 0 : index
    %c0_10 = arith.constant 0 : index
    %11 = vector.load %arg5[%c0_9, %c0_10] : memref<1x128xf32, #tpu.memory_space<vmem>>, vector<1x128xf32>
    %12 = vector.broadcast %11 : vector<1x128xf32> to vector<8x128xf32>
    %13 = arith.addf %10, %12 : vector<8x128xf32>
    %c0_11 = arith.constant 0 : index
    %c0_12 = arith.constant 0 : index
    %14 = vector.load %arg6[%c0_11, %c0_12] : memref<8x128xf32, #tpu.memory_space<vmem>>, vector<8x128xf32>
    tpu.vector_store %arg6[%c0_11, %c0_12], %13 {strides = array<i32>} : memref<8x128xf32, #tpu.memory_space<vmem>>, vector<8x128xf32>,
    return
  }
  func.func @transform_0(%arg0: i32) -> (i32, i32) {
    %c0_i32 = arith.constant 0 : i32
    %c0_i32_0 = arith.constant 0 : i32
    return %arg0, %c0_i32 : i32, i32
  }
  func.func @transform_1(%arg0: i32) -> (i32, i32) {
    %c0_i32 = arith.constant 0 : i32
    %c0_i32_0 = arith.constant 0 : i32
    %c0_i32_1 = arith.constant 0 : i32
    return %c0_i32, %c0_i32_0 : i32, i32
  }
  func.func @transform_2(%arg0: i32) -> (i32, i32) {
    %c0_i32 = arith.constant 0 : i32
    %c0_i32_0 = arith.constant 0 : i32
    %c0_i32_1 = arith.constant 0 : i32
    return %c0_i32, %c0_i32_0 : i32, i32
  }
  func.func @transform_3(%arg0: i32) -> (i32, i32) {
    %c0_i32 = arith.constant 0 : i32
    %c0_i32_0 = arith.constant 0 : i32
    %c0_i32_1 = arith.constant 0 : i32
    return %c0_i32, %c0_i32_0 : i32, i32
  }
  func.func @transform_4(%arg0: i32) -> (i32, i32) {
    %c0_i32 = arith.constant 0 : i32
    %c0_i32_0 = arith.constant 0 : i32
    %c0_i32_1 = arith.constant 0 : i32
    return %c0_i32, %c0_i32_0 : i32, i32
  }
  func.func @transform_5(%arg0: i32) -> (i32, i32) {
    %c0_i32 = arith.constant 0 : i32
    %c0_i32_0 = arith.constant 0 : i32
    return %arg0, %c0_i32 : i32, i32
  }
}

</mosaic_0001>

<llo_original>
// kernel: tpu_custom_call.1
$region0: #{tpu_custom_call.1}
  #allocation0 [shape = 'u32[]', space=smem, size = 0x4, offset = 0x4, fixed_abs, tag = 'smem constant byte address 0x4 - core index']
  #allocation1 [shape = 'u32[72,128]{1,0:T(1,128)}', space=vmem, size = 0x9000, scoped, tag = 'internal scratch']
  %s0 = inlined_call_operand.hbm [shape: bf16[16,256], index: 0, kind: input, shape index: {}]
  %s1 = inlined_call_operand.hbm [shape: bf16[256,512], index: 1, kind: input, shape index: {}]
  %s2 = inlined_call_operand.hbm [shape: f32[1,512], index: 2, kind: input, shape index: {}]
  %s3 = inlined_call_operand.hbm [shape: bf16[512,128], index: 3, kind: input, shape index: {}]
  %s4 = inlined_call_operand.vmem [shape: f32[1,128], index: 4, kind: input, shape index: {}]
  %s5 = inlined_call_operand.hbm [shape: f32[16,128], index: 5, kind: output, shape index: {}]
  %s6 = sld [smem:[#allocation0]]
  $region69: #{tpu_custom_call.1} parent=0
    _
  %s8 = ssub.s32 1, %s6
  %s9 = scalar_select 0, %s8, %s6
  $region1: #{tpu_custom_call.1} parent=0
    #allocation2 [shape = 'u8[8192]{0}', space=vmem, size = 0x2000, scoped, tag = 'input window, operand 0']
    #allocation3 [shape = 's32[2]{0}', space=sflag, size = 0x8, scoped, tag = 'scoped memory for tpu_custom_call.1']
    #allocation4 [shape = 's32[2]{0}', space=sflag, size = 0x8, scoped, tag = 'scoped memory for tpu_custom_call.1']
    #allocation5 [shape = 'u8[262144]{0}', space=vmem, size = 0x40000, scoped, tag = 'input window, operand 1, single buffered']
    #allocation6 [shape = 's32[1]{0}', space=sflag, size = 0x4, scoped, tag = 'scoped memory for tpu_custom_call.1']
    #allocation7 [shape = 'u8[2048]{0}', space=vmem, size = 0x800, scoped, tag = 'input window, operand 2, single buffered']
    #allocation8 [shape = 'u8[131072]{0}', space=vmem, size = 0x20000, scoped, tag = 'input window, operand 3, single buffered']
    #allocation9 [shape = 's32[1]{0}', space=sflag, size = 0x4, scoped, tag = 'scoped memory for tpu_custom_call.1']
    #allocation10 [shape = 'u8[8192]{0}', space=vmem, size = 0x2000, scoped, tag = 'output window, operand 0']
    %10 = vsyncpa [#allocation3], 0
    %s11 = scalar_lea.sflag [#allocation3], 1
    %12 = vsyncpa %s11, 0
    %13 = vsyncpa [#allocation6], 0
    %14 = vsyncpa [#allocation9], 0
    %15 = vsyncpa [#allocation4], 0
    %s16 = scalar_lea.sflag [#allocation4], 1
    %17 = vsyncpa %s16, 0
    loop: start=0, step=1, limit=4
    $region2: #{tpu_custom_call.1} parent=1 // loop_pre_header
      _
    $region3: #{tpu_custom_call.1} parent=1 // loop_header
      %s19 = sphi 0, %s23
      %p20 = scmp.ge.s32.totalorder %s19, 4
      %s29 = sphi 0, %s31
      %s32 = sphi 0, %s29
      %s33 = sphi 0, %s32
      %s49 = sphi 0, %s33
      %s53 = sphi 0, %s53
      %s55 = sphi 0, %s53
      %s56 = sphi 0, %s55
      %s70 = sphi 0, %s56
      %s74 = sphi 0, %s74
      %s76 = sphi 0, %s74
      %s77 = sphi 0, %s76
      %s91 = sphi 0, %s77
      %s95 = sphi 0, %s95
      %s97 = sphi 0, %s95
      %s98 = sphi 0, %s97
      %s112 = sphi 0, %s98
      %s116 = sphi 0, %s116
      %s118 = sphi 0, %s116
      %s119 = sphi 0, %s118
      %s133 = sphi 0, %s119
      %s139 = sphi 0, %s141
      %s142 = sphi 0, %s139
      %s143 = sphi 0, %s142
      %s159 = sphi 0, %s143
    $region4: #{tpu_custom_call.1} parent=1 // loop_header_branch
      %22 = sbr.rel (%p20) target = $region8
    $region5: #{tpu_custom_call.1} parent=1 // loop_body
      %s24 = ssub.s32 %s19, 1
      %s25 = ssub.s32 %s19, 2
      %s26 = sadd.s32 %s19, 1
      %s27 = ssub.s32 %s19, %s26
      %p28 = scmp.eq.s32.totalorder %s27, 0
      %s30 = sadd.s32 %s29, 1
      %s31 = scalar_select %p28, %s29, %s30
      %p34 = pneg %p28
      %p35 = scmp.eq.s32.totalorder %s19, 1
      %p36 = por %p34, %p35
      %p37 = scmp.ne.s32.totalorder %s29, %s32
      %p38 = scmp.eq.s32.totalorder %s19, 0
      %p39 = por %p37, %p38
      %p40 = scmp.ne.s32.totalorder %s29, %s32
      %p41 = scmp.eq.s32.totalorder %s24, 1
      %p42 = por %p40, %p41
      %p43 = scmp.ne.s32.totalorder %s32, %s33
      %p44 = scmp.eq.s32.totalorder %s24, 0
      %p45 = por %p43, %p44
      %p46 = scmp.ne.s32.totalorder %s32, %s33
      %p47 = scmp.eq.s32.totalorder %s25, 1
      %p48 = por %p46, %p47
      %p50 = scmp.ne.s32.totalorder %s33, %s49
      %p51 = scmp.eq.s32.totalorder %s25, 0
      %p52 = por %p50, %p51
      %s54 = sadd.s32 %s53, 1
      %p57 = scmp.eq.s32.totalorder %s19, 1
      %p58 = scmp.ne.s32.totalorder %s53, %s55
      %p59 = scmp.eq.s32.totalorder %s19, 0
      %p60 = por %p58, %p59
      %p61 = scmp.ne.s32.totalorder %s53, %s55
      %p62 = scmp.eq.s32.totalorder %s24, 1
      %p63 = por %p61, %p62
      %p64 = scmp.ne.s32.totalorder %s55, %s56
      %p65 = scmp.eq.s32.totalorder %s24, 0
      %p66 = por %p64, %p65
      %p67 = scmp.ne.s32.totalorder %s55, %s56
      %p68 = scmp.eq.s32.totalorder %s25, 1
      %p69 = por %p67, %p68
      %p71 = scmp.ne.s32.totalorder %s56, %s70
      %p72 = scmp.eq.s32.totalorder %s25, 0
      %p73 = por %p71, %p72
      %s75 = sadd.s32 %s74, 1
      %p78 = scmp.eq.s32.totalorder %s19, 1
      %p79 = scmp.ne.s32.totalorder %s74, %s76
      %p80 = scmp.eq.s32.totalorder %s19, 0
      %p81 = por %p79, %p80
      %p82 = scmp.ne.s32.totalorder %s74, %s76
      %p83 = scmp.eq.s32.totalorder %s24, 1
      %p84 = por %p82, %p83
      %p85 = scmp.ne.s32.totalorder %s76, %s77
      %p86 = scmp.eq.s32.totalorder %s24, 0
      %p87 = por %p85, %p86
      %p88 = scmp.ne.s32.totalorder %s76, %s77
      %p89 = scmp.eq.s32.totalorder %s25, 1
      %p90 = por %p88, %p89
      %p92 = scmp.ne.s32.totalorder %s77, %s91
      %p93 = scmp.eq.s32.totalorder %s25, 0
      %p94 = por %p92, %p93
      %s96 = sadd.s32 %s95, 1
      %p99 = scmp.eq.s32.totalorder %s19, 1
      %p100 = scmp.ne.s32.totalorder %s95, %s97
      %p101 = scmp.eq.s32.totalorder %s19, 0
      %p102 = por %p100, %p101
      %p103 = scmp.ne.s32.totalorder %s95, %s97
      %p104 = scmp.eq.s32.totalorder %s24, 1
      %p105 = por %p103, %p104
      %p106 = scmp.ne.s32.totalorder %s97, %s98
      %p107 = scmp.eq.s32.totalorder %s24, 0
      %p108 = por %p106, %p107
      %p109 = scmp.ne.s32.totalorder %s97, %s98
      %p110 = scmp.eq.s32.totalorder %s25, 1
      %p111 = por %p109, %p110
      %p113 = scmp.ne.s32.totalorder %s98, %s112
      %p114 = scmp.eq.s32.totalorder %s25, 0
      %p115 = por %p113, %p114
      %s117 = sadd.s32 %s116, 1
      %p120 = scmp.eq.s32.totalorder %s19, 1
      %p121 = scmp.ne.s32.totalorder %s116, %s118
      %p122 = scmp.eq.s32.totalorder %s19, 0
      %p123 = por %p121, %p122
      %p124 = scmp.ne.s32.totalorder %s116, %s118
      %p125 = scmp.eq.s32.totalorder %s24, 1
      %p126 = por %p124, %p125
      %p127 = scmp.ne.s32.totalorder %s118, %s119
      %p128 = scmp.eq.s32.totalorder %s24, 0
      %p129 = por %p127, %p128
      %p130 = scmp.ne.s32.totalorder %s118, %s119
      %p131 = scmp.eq.s32.totalorder %s25, 1
      %p132 = por %p130, %p131
      %p134 = scmp.ne.s32.totalorder %s119, %s133
      %p135 = scmp.eq.s32.totalorder %s25, 0
      %p136 = por %p134, %p135
      %s137 = ssub.s32 %s19, %s26
      %p138 = scmp.eq.s32.totalorder %s137, 0
      %s140 = sadd.s32 %s139, 1
      %s141 = scalar_select %p138, %s139, %s140
      %p144 = pneg %p138
      %p145 = scmp.eq.s32.totalorder %s19, 1
      %p146 = por %p144, %p145
      %p147 = scmp.ne.s32.totalorder %s139, %s142
      %p148 = scmp.eq.s32.totalorder %s19, 0
      %p149 = por %p147, %p148
      %p150 = scmp.ne.s32.totalorder %s139, %s142
      %p151 = scmp.eq.s32.totalorder %s24, 1
      %p152 = por %p150, %p151
      %p153 = scmp.ne.s32.totalorder %s142, %s143
      %p154 = scmp.eq.s32.totalorder %s24, 0
      %p155 = por %p153, %p154
      %p156 = scmp.ne.s32.totalorder %s142, %s143
      %p157 = scmp.eq.s32.totalorder %s25, 1
      %p158 = por %p156, %p157
      %p160 = scmp.ne.s32.totalorder %s143, %s159
      %p161 = scmp.eq.s32.totalorder %s25, 0
      %p162 = por %p160, %p161
      %p163 = scmp.le.s32.totalorder 1, %s19
      %p164 = scmp.lt.s32.totalorder %s19, 3
      %p165 = pnand %p163, %p164
      %p166 = pneg %p165
      // Predicated region
      $region9: #{tpu_custom_call.1} parent=5 // pred_check
        _
      $region10: #{tpu_custom_call.1} parent=5 // pred_check_branch
        %168 = sbr.rel (%p165) target = $region12
      $region11: #{tpu_custom_call.1} parent=5 // pred_region
        %s169 = ssub.s32 %s19, 1
        // Predicated region
        $region13: #{tpu_custom_call.1} parent=11 // pred_check
          %p170 = pneg %p66
        $region14: #{tpu_custom_call.1} parent=11 // pred_check_branch
          %172 = sbr.rel (%p170) target = $region16
        $region15: #{tpu_custom_call.1} parent=11 // pred_region
          %174 = vsyncadd [#allocation6], 0
          %s175 = sshll.u32 %s1, 4
          %s176 = int_to_ptr.hbm [resolvable:$true] %s175
          %s177 = sshll.u32 [#allocation5], 4
          %s178 = int_to_ptr.vmem [resolvable:$true] %s177
          %183 = dma.hbm_to_vmem [thread:$0]  %s176, 8192, %s178, [#allocation6], 256, 256, 16
        $region16: #{tpu_custom_call.1} parent=11 // pred_fallthru
          _
        // Predicated region
        $region17: #{tpu_custom_call.1} parent=11 // pred_check
          %p184 = pneg %p87
        $region18: #{tpu_custom_call.1} parent=11 // pred_check_branch
          %186 = sbr.rel (%p184) target = $region20
        $region19: #{tpu_custom_call.1} parent=11 // pred_region
          %188 = vsyncadd [#allocation6], 0
          %s190 = sshll.u32 %s2, 4
          %s191 = int_to_ptr.hbm [resolvable:$true] %s190
          %s192 = sshll.u32 [#allocation7], 4
          %s193 = int_to_ptr.vmem [resolvable:$true] %s192
          %195 = dma.hbm_to_vmem [thread:$0]  %s191, 64, %s193, [#allocation6]
        $region20: #{tpu_custom_call.1} parent=11 // pred_fallthru
          _
        // Predicated region
        $region21: #{tpu_custom_call.1} parent=11 // pred_check
          %p196 = pneg %p108
        $region22: #{tpu_custom_call.1} parent=11 // pred_check_branch
          %198 = sbr.rel (%p196) target = $region24
        $region23: #{tpu_custom_call.1} parent=11 // pred_region
          %200 = vsyncadd [#allocation9], 0
          %s201 = sshll.u32 %s3, 4
          %s202 = int_to_ptr.hbm [resolvable:$true] %s201
          %s203 = sshll.u32 [#allocation8], 4
          %s204 = int_to_ptr.vmem [resolvable:$true] %s203
          %209 = dma.hbm_to_vmem [thread:$0]  %s202, 4096, %s204, [#allocation9], 64, 64, 4
        $region24: #{tpu_custom_call.1} parent=11 // pred_fallthru
          _
        // Predicated region
        $region25: #{tpu_custom_call.1} parent=11 // pred_check
          %p210 = pneg %p129
        $region26: #{tpu_custom_call.1} parent=11 // pred_check_branch
          %212 = sbr.rel (%p210) target = $region28
        $region27: #{tpu_custom_call.1} parent=11 // pred_region
          _
        $region28: #{tpu_custom_call.1} parent=11 // pred_fallthru
          _
      $region12: #{tpu_custom_call.1} parent=5 // pred_fallthru
        _
      %p213 = scmp.lt.s32.totalorder %s19, 2
      // Predicated region
      $region29: #{tpu_custom_call.1} parent=5 // pred_check
        %p214 = pneg %p213
      $region30: #{tpu_custom_call.1} parent=5 // pred_check_branch
        %216 = sbr.rel (%p214) target = $region32
      $region31: #{tpu_custom_call.1} parent=5 // pred_region
        // Predicated region
        $region33: #{tpu_custom_call.1} parent=31 // pred_check
          %p217 = pneg %p39
        $region34: #{tpu_custom_call.1} parent=31 // pred_check_branch
          %219 = sbr.rel (%p217) target = $region36
        $region35: #{tpu_custom_call.1} parent=31 // pred_region
          %s220 = sand.u32 %s29, 1
          %s221 = scalar_lea.sflag [#allocation3], %s220
          %s222 = sand.u32 %s29, 1
          %s223 = smul.addr %s222, 8
          %s224 = scalar_lea.vmem [#allocation2], %s223
          %226 = vsyncadd %s221, 0
          %s227 = smul.addr %s19, 2
          %s228 = smul.addr %s227, 4
          %s229 = scalar_lea.hbm %s0, %s228
          %s231 = sshll.u32 %s229, 4
          %s232 = int_to_ptr.hbm [resolvable:$true] %s231
          %s233 = sshll.u32 %s224, 4
          %s234 = int_to_ptr.vmem [resolvable:$true] %s233
          %236 = dma.hbm_to_vmem [thread:$0]  %s232, 128, %s234, %s221
        $region36: #{tpu_custom_call.1} parent=31 // pred_fallthru
          _
      $region32: #{tpu_custom_call.1} parent=5 // pred_fallthru
        _
      %p237 = scmp.le.s32.totalorder 1, %s19
      %p238 = scmp.lt.s32.totalorder %s19, 3
      %p239 = pnand %p237, %p238
      %p240 = pneg %p239
      // Predicated region
      $region37: #{tpu_custom_call.1} parent=5 // pred_check
        _
      $region38: #{tpu_custom_call.1} parent=5 // pred_check_branch
        %242 = sbr.rel (%p239) target = $region40
      $region39: #{tpu_custom_call.1} parent=5 // pred_region
        %s243 = ssub.s32 %s19, 1
        %s244 = sand.u32 %s32, 1
        %s245 = scalar_lea.sflag [#allocation3], %s244
        %s246 = sand.u32 %s32, 1
        %s247 = smul.addr %s246, 8
        %s248 = scalar_lea.vmem [#allocation2], %s247
        // Predicated region
        $region41: #{tpu_custom_call.1} parent=39 // pred_check
          %p249 = pneg %p45
        $region42: #{tpu_custom_call.1} parent=39 // pred_check_branch
          %251 = sbr.rel (%p249) target = $region44
        $region43: #{tpu_custom_call.1} parent=39 // pred_region
          %253 = dma.done %s245, 128
        $region44: #{tpu_custom_call.1} parent=39 // pred_fallthru
          _
        // Predicated region
        $region45: #{tpu_custom_call.1} parent=39 // pred_check
          %p254 = pneg %p66
        $region46: #{tpu_custom_call.1} parent=39 // pred_check_branch
          %256 = sbr.rel (%p254) target = $region48
        $region47: #{tpu_custom_call.1} parent=39 // pred_region
          %258 = dma.done [#allocation6], 8192
        $region48: #{tpu_custom_call.1} parent=39 // pred_fallthru
          _
        // Predicated region
        $region49: #{tpu_custom_call.1} parent=39 // pred_check
          %p259 = pneg %p87
        $region50: #{tpu_custom_call.1} parent=39 // pred_check_branch
          %261 = sbr.rel (%p259) target = $region52
        $region51: #{tpu_custom_call.1} parent=39 // pred_region
          %263 = dma.done [#allocation6], 64
        $region52: #{tpu_custom_call.1} parent=39 // pred_fallthru
          _
        // Predicated region
        $region53: #{tpu_custom_call.1} parent=39 // pred_check
          %p264 = pneg %p108
        $region54: #{tpu_custom_call.1} parent=39 // pred_check_branch
          %266 = sbr.rel (%p264) target = $region56
        $region55: #{tpu_custom_call.1} parent=39 // pred_region
          %268 = dma.done [#allocation9], 4096
        $region56: #{tpu_custom_call.1} parent=39 // pred_fallthru
          _
        %s269 = sand.u32 %s32, 1
        %s270 = scalar_lea.sflag [#allocation3], %s269
        %s271 = sand.u32 %s32, 1
        %s272 = smul.addr %s271, 8
        %s273 = scalar_lea.vmem [#allocation2], %s272
        %p274 = pneg %p45
        %p275 = pneg %p42
        %p276 = pneg %p66
        %p277 = pneg %p63
        %p278 = pneg %p87
        %p279 = pneg %p84
        %p280 = pneg %p108
        %p281 = pneg %p105
        %p282 = pneg %p129
        %p283 = pneg %p126
        %p284 = pneg %p155
        %p285 = pneg %p152
        %s286 = sand.u32 %s142, 1
        %s287 = scalar_lea.sflag [#allocation4], %s286
        %s288 = sand.u32 %s142, 1
        %s289 = smul.addr %s288, 8
        %s290 = scalar_lea.vmem [#allocation10], %s289
        %v291 = vld [vmem:[%s248] sm:$0xff]
        %v292 = vld [vmem:[#allocation5] sm:$0xff]
        %v293 = vld [vmem:[#allocation5 + $0x8] sm:$0xff]
        %v294 = vld [vmem:[#allocation5 + $0x10] sm:$0xff]
        %v295 = vld [vmem:[#allocation5 + $0x18] sm:$0xff]
        %v296 = vld [vmem:[#allocation5 + $0x20] sm:$0xff]
        %v297 = vld [vmem:[#allocation5 + $0x28] sm:$0xff]
        %v298 = vld [vmem:[#allocation5 + $0x30] sm:$0xff]
        %v299 = vld [vmem:[#allocation5 + $0x38] sm:$0xff]
        %v300 = vld [vmem:[#allocation5 + $0x40] sm:$0xff]
        %v301 = vld [vmem:[#allocation5 + $0x48] sm:$0xff]
        %v302 = vld [vmem:[#allocation5 + $0x50] sm:$0xff]
        %v303 = vld [vmem:[#allocation5 + $0x58] sm:$0xff]
        %v304 = vld [vmem:[#allocation5 + $0x60] sm:$0xff]
        %v305 = vld [vmem:[#allocation5 + $0x68] sm:$0xff]
        %v306 = vld [vmem:[#allocation5 + $0x70] sm:$0xff]
        %v307 = vld [vmem:[#allocation5 + $0x78] sm:$0xff]
        %v308 = vld [vmem:[#allocation5 + $0x80] sm:$0xff]
        %v309 = vld [vmem:[#allocation5 + $0x88] sm:$0xff]
        %v310 = vld [vmem:[#allocation5 + $0x90] sm:$0xff]
        %v311 = vld [vmem:[#allocation5 + $0x98] sm:$0xff]
        %v312 = vld [vmem:[#allocation5 + $0xa0] sm:$0xff]
        %v313 = vld [vmem:[#allocation5 + $0xa8] sm:$0xff]
        %v314 = vld [vmem:[#allocation5 + $0xb0] sm:$0xff]
        %v315 = vld [vmem:[#allocation5 + $0xb8] sm:$0xff]
        %v316 = vld [vmem:[#allocation5 + $0xc0] sm:$0xff]
        %v317 = vld [vmem:[#allocation5 + $0xc8] sm:$0xff]
        %v318 = vld [vmem:[#allocation5 + $0xd0] sm:$0xff]
        %v319 = vld [vmem:[#allocation5 + $0xd8] sm:$0xff]
        %v320 = vld [vmem:[#allocation5 + $0xe0] sm:$0xff]
        %v321 = vld [vmem:[#allocation5 + $0xe8] sm:$0xff]
        %v322 = vld [vmem:[#allocation5 + $0xf0] sm:$0xff]
        %v323 = vld [vmem:[#allocation5 + $0xf8] sm:$0xff]
        %v324 = vld [vmem:[#allocation5 + $0x100] sm:$0xff]
        %v325 = vld [vmem:[#allocation5 + $0x108] sm:$0xff]
        %v326 = vld [vmem:[#allocation5 + $0x110] sm:$0xff]
        %v327 = vld [vmem:[#allocation5 + $0x118] sm:$0xff]
        %v328 = vld [vmem:[#allocation5 + $0x120] sm:$0xff]
        %v329 = vld [vmem:[#allocation5 + $0x128] sm:$0xff]
        %v330 = vld [vmem:[#allocation5 + $0x130] sm:$0xff]
        %v331 = vld [vmem:[#allocation5 + $0x138] sm:$0xff]
        %v332 = vld [vmem:[#allocation5 + $0x140] sm:$0xff]
        %v333 = vld [vmem:[#allocation5 + $0x148] sm:$0xff]
        %v334 = vld [vmem:[#allocation5 + $0x150] sm:$0xff]
        %v335 = vld [vmem:[#allocation5 + $0x158] sm:$0xff]
        %v336 = vld [vmem:[#allocation5 + $0x160] sm:$0xff]
        %v337 = vld [vmem:[#allocation5 + $0x168] sm:$0xff]
        %v338 = vld [vmem:[#allocation5 + $0x170] sm:$0xff]
        %v339 = vld [vmem:[#allocation5 + $0x178] sm:$0xff]
        %v340 = vld [vmem:[#allocation5 + $0x180] sm:$0xff]
        %v341 = vld [vmem:[#allocation5 + $0x188] sm:$0xff]
        %v342 = vld [vmem:[#allocation5 + $0x190] sm:$0xff]
        %v343 = vld [vmem:[#allocation5 + $0x198] sm:$0xff]
        %v344 = vld [vmem:[#allocation5 + $0x1a0] sm:$0xff]
        %v345 = vld [vmem:[#allocation5 + $0x1a8] sm:$0xff]
        %v346 = vld [vmem:[#allocation5 + $0x1b0] sm:$0xff]
        %v347 = vld [vmem:[#allocation5 + $0x1b8] sm:$0xff]
        %v348 = vld [vmem:[#allocation5 + $0x1c0] sm:$0xff]
        %v349 = vld [vmem:[#allocation5 + $0x1c8] sm:$0xff]
        %v350 = vld [vmem:[#allocation5 + $0x1d0] sm:$0xff]
        %v351 = vld [vmem:[#allocation5 + $0x1d8] sm:$0xff]
        %v352 = vld [vmem:[#allocation5 + $0x1e0] sm:$0xff]
        %v353 = vld [vmem:[#allocation5 + $0x1e8] sm:$0xff]
        %v354 = vld [vmem:[#allocation5 + $0x1f0] sm:$0xff]
        %v355 = vld [vmem:[#allocation5 + $0x1f8] sm:$0xff]
        %v356 = vld [vmem:[#allocation7] sm:$0xf]
        %v358 = vperm.slane %v356, 0
        %v359 = vperm.slane %v356, 1
        %v360 = vperm.slane %v356, 2
        %v361 = vperm.slane %v356, 3
        %v367 = vunpack.c.l.b16 %v291
        %v368 = vunpack.c.h.b16 %v291
        %v369 = vpack.c.b16 %v367, %v367
        %v370 = vpack.c.b16 %v368, %v368
        %v437 = vunpack.c.l.b16 %v292
        %v438 = vunpack.c.h.b16 %v292
        %v439 = vunpack.c.l.b16 %v293
        %v440 = vunpack.c.h.b16 %v293
        %v441 = vunpack.c.l.b16 %v294
        %v442 = vunpack.c.h.b16 %v294
        %v443 = vunpack.c.l.b16 %v295
        %v444 = vunpack.c.h.b16 %v295
        %v445 = vunpack.c.l.b16 %v296
        %v446 = vunpack.c.h.b16 %v296
        %v447 = vunpack.c.l.b16 %v297
        %v448 = vunpack.c.h.b16 %v297
        %v449 = vunpack.c.l.b16 %v298
        %v450 = vunpack.c.h.b16 %v298
        %v451 = vunpack.c.l.b16 %v299
        %v452 = vunpack.c.h.b16 %v299
        %v453 = vunpack.c.l.b16 %v300
        %v454 = vunpack.c.h.b16 %v300
        %v455 = vunpack.c.l.b16 %v301
        %v456 = vunpack.c.h.b16 %v301
        %v457 = vunpack.c.l.b16 %v302
        %v458 = vunpack.c.h.b16 %v302
        %v459 = vunpack.c.l.b16 %v303
        %v460 = vunpack.c.h.b16 %v303
        %v461 = vunpack.c.l.b16 %v304
        %v462 = vunpack.c.h.b16 %v304
        %v463 = vunpack.c.l.b16 %v305
        %v464 = vunpack.c.h.b16 %v305
        %v465 = vunpack.c.l.b16 %v306
        %v466 = vunpack.c.h.b16 %v306
        %v467 = vunpack.c.l.b16 %v307
        %v468 = vunpack.c.h.b16 %v307
        %v469 = vunpack.c.l.b16 %v308
        %v470 = vunpack.c.h.b16 %v308
        %v471 = vunpack.c.l.b16 %v309
        %v472 = vunpack.c.h.b16 %v309
        %v473 = vunpack.c.l.b16 %v310
        %v474 = vunpack.c.h.b16 %v310
        %v475 = vunpack.c.l.b16 %v311
        %v476 = vunpack.c.h.b16 %v311
        %v477 = vunpack.c.l.b16 %v312
        %v478 = vunpack.c.h.b16 %v312
        %v479 = vunpack.c.l.b16 %v313
        %v480 = vunpack.c.h.b16 %v313
        %v481 = vunpack.c.l.b16 %v314
        %v482 = vunpack.c.h.b16 %v314
        %v483 = vunpack.c.l.b16 %v315
        %v484 = vunpack.c.h.b16 %v315
        %v485 = vunpack.c.l.b16 %v316
        %v486 = vunpack.c.h.b16 %v316
        %v487 = vunpack.c.l.b16 %v317
        %v488 = vunpack.c.h.b16 %v317
        %v489 = vunpack.c.l.b16 %v318
        %v490 = vunpack.c.h.b16 %v318
        %v491 = vunpack.c.l.b16 %v319
        %v492 = vunpack.c.h.b16 %v319
        %v493 = vunpack.c.l.b16 %v320
        %v494 = vunpack.c.h.b16 %v320
        %v495 = vunpack.c.l.b16 %v321
        %v496 = vunpack.c.h.b16 %v321
        %v497 = vunpack.c.l.b16 %v322
        %v498 = vunpack.c.h.b16 %v322
        %v499 = vunpack.c.l.b16 %v323
        %v500 = vunpack.c.h.b16 %v323
        %v501 = vunpack.c.l.b16 %v324
        %v502 = vunpack.c.h.b16 %v324
        %v503 = vunpack.c.l.b16 %v325
        %v504 = vunpack.c.h.b16 %v325
        %v505 = vunpack.c.l.b16 %v326
        %v506 = vunpack.c.h.b16 %v326
        %v507 = vunpack.c.l.b16 %v327
        %v508 = vunpack.c.h.b16 %v327
        %v509 = vunpack.c.l.b16 %v328
        %v510 = vunpack.c.h.b16 %v328
        %v511 = vunpack.c.l.b16 %v329
        %v512 = vunpack.c.h.b16 %v329
        %v513 = vunpack.c.l.b16 %v330
        %v514 = vunpack.c.h.b16 %v330
        %v515 = vunpack.c.l.b16 %v331
        %v516 = vunpack.c.h.b16 %v331
        %v517 = vunpack.c.l.b16 %v332
        %v518 = vunpack.c.h.b16 %v332
        %v519 = vunpack.c.l.b16 %v333
        %v520 = vunpack.c.h.b16 %v333
        %v521 = vunpack.c.l.b16 %v334
        %v522 = vunpack.c.h.b16 %v334
        %v523 = vunpack.c.l.b16 %v335
        %v524 = vunpack.c.h.b16 %v335
        %v525 = vunpack.c.l.b16 %v336
        %v526 = vunpack.c.h.b16 %v336
        %v527 = vunpack.c.l.b16 %v337
        %v528 = vunpack.c.h.b16 %v337
        %v529 = vunpack.c.l.b16 %v338
        %v530 = vunpack.c.h.b16 %v338
        %v531 = vunpack.c.l.b16 %v339
        %v532 = vunpack.c.h.b16 %v339
        %v533 = vunpack.c.l.b16 %v340
        %v534 = vunpack.c.h.b16 %v340
        %v535 = vunpack.c.l.b16 %v341
        %v536 = vunpack.c.h.b16 %v341
        %v537 = vunpack.c.l.b16 %v342
        %v538 = vunpack.c.h.b16 %v342
        %v539 = vunpack.c.l.b16 %v343
        %v540 = vunpack.c.h.b16 %v343
        %v541 = vunpack.c.l.b16 %v344
        %v542 = vunpack.c.h.b16 %v344
        %v543 = vunpack.c.l.b16 %v345
        %v544 = vunpack.c.h.b16 %v345
        %v545 = vunpack.c.l.b16 %v346
        %v546 = vunpack.c.h.b16 %v346
        %v547 = vunpack.c.l.b16 %v347
        %v548 = vunpack.c.h.b16 %v347
        %v549 = vunpack.c.l.b16 %v348
        %v550 = vunpack.c.h.b16 %v348
        %v551 = vunpack.c.l.b16 %v349
        %v552 = vunpack.c.h.b16 %v349
        %v553 = vunpack.c.l.b16 %v350
        %v554 = vunpack.c.h.b16 %v350
        %v555 = vunpack.c.l.b16 %v351
        %v556 = vunpack.c.h.b16 %v351
        %v557 = vunpack.c.l.b16 %v352
        %v558 = vunpack.c.h.b16 %v352
        %v559 = vunpack.c.l.b16 %v353
        %v560 = vunpack.c.h.b16 %v353
        %v561 = vunpack.c.l.b16 %v354
        %v562 = vunpack.c.h.b16 %v354
        %v563 = vunpack.c.l.b16 %v355
        %v564 = vunpack.c.h.b16 %v355
        %v565 = vpack.c.b16 %v441, %v437
        %v566 = vpack.c.b16 %v442, %v438
        %v567 = vpack.c.b16 %v443, %v439
        %v568 = vpack.c.b16 %v444, %v440
        %v569 = vpack.c.b16 %v449, %v445
        %v570 = vpack.c.b16 %v450, %v446
        %v571 = vpack.c.b16 %v451, %v447
        %v572 = vpack.c.b16 %v452, %v448
        %v573 = vpack.c.b16 %v457, %v453
        %v574 = vpack.c.b16 %v458, %v454
        %v575 = vpack.c.b16 %v459, %v455
        %v576 = vpack.c.b16 %v460, %v456
        %v577 = vpack.c.b16 %v465, %v461
        %v578 = vpack.c.b16 %v466, %v462
        %v579 = vpack.c.b16 %v467, %v463
        %v580 = vpack.c.b16 %v468, %v464
        %v581 = vpack.c.b16 %v473, %v469
        %v582 = vpack.c.b16 %v474, %v470
        %v583 = vpack.c.b16 %v475, %v471
        %v584 = vpack.c.b16 %v476, %v472
        %v585 = vpack.c.b16 %v481, %v477
        %v586 = vpack.c.b16 %v482, %v478
        %v587 = vpack.c.b16 %v483, %v479
        %v588 = vpack.c.b16 %v484, %v480
        %v589 = vpack.c.b16 %v489, %v485
        %v590 = vpack.c.b16 %v490, %v486
        %v591 = vpack.c.b16 %v491, %v487
        %v592 = vpack.c.b16 %v492, %v488
        %v593 = vpack.c.b16 %v497, %v493
        %v594 = vpack.c.b16 %v498, %v494
        %v595 = vpack.c.b16 %v499, %v495
        %v596 = vpack.c.b16 %v500, %v496
        %v597 = vpack.c.b16 %v505, %v501
        %v598 = vpack.c.b16 %v506, %v502
        %v599 = vpack.c.b16 %v507, %v503
        %v600 = vpack.c.b16 %v508, %v504
        %v601 = vpack.c.b16 %v513, %v509
        %v602 = vpack.c.b16 %v514, %v510
        %v603 = vpack.c.b16 %v515, %v511
        %v604 = vpack.c.b16 %v516, %v512
        %v605 = vpack.c.b16 %v521, %v517
        %v606 = vpack.c.b16 %v522, %v518
        %v607 = vpack.c.b16 %v523, %v519
        %v608 = vpack.c.b16 %v524, %v520
        %v609 = vpack.c.b16 %v529, %v525
        %v610 = vpack.c.b16 %v530, %v526
        %v611 = vpack.c.b16 %v531, %v527
        %v612 = vpack.c.b16 %v532, %v528
        %v613 = vpack.c.b16 %v537, %v533
        %v614 = vpack.c.b16 %v538, %v534
        %v615 = vpack.c.b16 %v539, %v535
        %v616 = vpack.c.b16 %v540, %v536
        %v617 = vpack.c.b16 %v545, %v541
        %v618 = vpack.c.b16 %v546, %v542
        %v619 = vpack.c.b16 %v547, %v543
        %v620 = vpack.c.b16 %v548, %v544
        %v621 = vpack.c.b16 %v553, %v549
        %v622 = vpack.c.b16 %v554, %v550
        %v623 = vpack.c.b16 %v555, %v551
        %v624 = vpack.c.b16 %v556, %v552
        %v625 = vpack.c.b16 %v561, %v557
        %v626 = vpack.c.b16 %v562, %v558
        %v627 = vpack.c.b16 %v563, %v559
        %v628 = vpack.c.b16 %v564, %v560
        %693 = vmatpush.bf16.msra.mxu0 %v593
        %694 = vmatpush.bf16.msra.mxu0 %v589
        %695 = vmatpush.bf16.msra.mxu0 %v585
        %696 = vmatpush.bf16.msra.mxu0 %v581
        %697 = vmatpush.bf16.msra.mxu0 %v577
        %698 = vmatpush.bf16.msra.mxu0 %v573
        %699 = vmatpush.bf16.msra.mxu0 %v569
        %700 = vmatpush.bf16.msra.mxu0 %v565
        %701 = vmatmul.bf16.gmra.mxu0 %v369
        %v702 = vpop.f32.mrf.mxu0
        %v703 = vadd.f32 %v358, %v702
        %v704 = vpop.f32.mrf.mxu0
        %705 = vdwg.mxu0
        %706 = vmatpush.bf16.msra.mxu0 %v625
        %707 = vmatpush.bf16.msra.mxu0 %v621
        %708 = vmatpush.bf16.msra.mxu0 %v617
        %709 = vmatpush.bf16.msra.mxu0 %v613
        %710 = vmatpush.bf16.msra.mxu0 %v609
        %711 = vmatpush.bf16.msra.mxu0 %v605
        %712 = vmatpush.bf16.msra.mxu0 %v601
        %713 = vmatpush.bf16.msra.mxu0 %v597
        %714 = vmatmul.bf16.gmra.mxu0 %v370
        %v715 = vpop.f32.mrf.mxu0
        %v716 = vadd.f32 %v703, %v715
        %v717 = vpop.f32.mrf.mxu0
        %718 = vdwg.mxu0
        %719 = vmatpush.bf16.msra.mxu0 %v594
        %720 = vmatpush.bf16.msra.mxu0 %v590
        %721 = vmatpush.bf16.msra.mxu0 %v586
        %722 = vmatpush.bf16.msra.mxu0 %v582
        %723 = vmatpush.bf16.msra.mxu0 %v578
        %724 = vmatpush.bf16.msra.mxu0 %v574
        %725 = vmatpush.bf16.msra.mxu0 %v570
        %726 = vmatpush.bf16.msra.mxu0 %v566
        %727 = vmatmul.bf16.gmra.mxu0 %v369
        %v728 = vpop.f32.mrf.mxu0
        %v729 = vadd.f32 %v359, %v728
        %v730 = vpop.f32.mrf.mxu0
        %731 = vdwg.mxu0
        %732 = vmatpush.bf16.msra.mxu0 %v626
        %733 = vmatpush.bf16.msra.mxu0 %v622
        %734 = vmatpush.bf16.msra.mxu0 %v618
        %735 = vmatpush.bf16.msra.mxu0 %v614
        %736 = vmatpush.bf16.msra.mxu0 %v610
        %737 = vmatpush.bf16.msra.mxu0 %v606
        %738 = vmatpush.bf16.msra.mxu0 %v602
        %739 = vmatpush.bf16.msra.mxu0 %v598
        %740 = vmatmul.bf16.gmra.mxu0 %v370
        %v741 = vpop.f32.mrf.mxu0
        %v742 = vadd.f32 %v729, %v741
        %v743 = vpop.f32.mrf.mxu0
        %744 = vdwg.mxu0
        %745 = vmatpush.bf16.msra.mxu0 %v595
        %746 = vmatpush.bf16.msra.mxu0 %v591
        %747 = vmatpush.bf16.msra.mxu0 %v587
        %748 = vmatpush.bf16.msra.mxu0 %v583
        %749 = vmatpush.bf16.msra.mxu0 %v579
        %750 = vmatpush.bf16.msra.mxu0 %v575
        %751 = vmatpush.bf16.msra.mxu0 %v571
        %752 = vmatpush.bf16.msra.mxu0 %v567
        %753 = vmatmul.bf16.gmra.mxu0 %v369
        %v754 = vpop.f32.mrf.mxu0
        %v755 = vadd.f32 %v360, %v754
        %v756 = vpop.f32.mrf.mxu0
        %757 = vdwg.mxu0
        %758 = vmatpush.bf16.msra.mxu0 %v627
        %759 = vmatpush.bf16.msra.mxu0 %v623
        %760 = vmatpush.bf16.msra.mxu0 %v619
        %761 = vmatpush.bf16.msra.mxu0 %v615
        %762 = vmatpush.bf16.msra.mxu0 %v611
        %763 = vmatpush.bf16.msra.mxu0 %v607
        %764 = vmatpush.bf16.msra.mxu0 %v603
        %765 = vmatpush.bf16.msra.mxu0 %v599
        %766 = vmatmul.bf16.gmra.mxu0 %v370
        %v767 = vpop.f32.mrf.mxu0
        %v768 = vadd.f32 %v755, %v767
        %v769 = vpop.f32.mrf.mxu0
        %770 = vdwg.mxu0
        %771 = vmatpush.bf16.msra.mxu0 %v596
        %772 = vmatpush.bf16.msra.mxu0 %v592
        %773 = vmatpush.bf16.msra.mxu0 %v588
        %774 = vmatpush.bf16.msra.mxu0 %v584
        %775 = vmatpush.bf16.msra.mxu0 %v580
        %776 = vmatpush.bf16.msra.mxu0 %v576
        %777 = vmatpush.bf16.msra.mxu0 %v572
        %778 = vmatpush.bf16.msra.mxu0 %v568
        %779 = vmatmul.bf16.gmra.mxu0 %v369
        %v780 = vpop.f32.mrf.mxu0
        %v781 = vadd.f32 %v361, %v780
        %v782 = vpop.f32.mrf.mxu0
        %783 = vdwg.mxu0
        %784 = vmatpush.bf16.msra.mxu0 %v628
        %785 = vmatpush.bf16.msra.mxu0 %v624
        %786 = vmatpush.bf16.msra.mxu0 %v620
        %787 = vmatpush.bf16.msra.mxu0 %v616
        %788 = vmatpush.bf16.msra.mxu0 %v612
        %789 = vmatpush.bf16.msra.mxu0 %v608
        %790 = vmatpush.bf16.msra.mxu0 %v604
        %791 = vmatpush.bf16.msra.mxu0 %v600
        %792 = vmatmul.bf16.gmra.mxu0 %v370
        %v793 = vpop.f32.mrf.mxu0
        %v794 = vadd.f32 %v781, %v793
        %v795 = vpop.f32.mrf.mxu0
        %796 = vdwg.mxu0
        %v797 = vmax.f32 %v716, 0.0
        %v798 = vmax.f32 %v742, 0.0
        %v799 = vmax.f32 %v768, 0.0
        %v800 = vmax.f32 %v794, 0.0
        %v801 = vpack.c.bf16 %v797, %v797
        %v802 = vpack.c.bf16 %v798, %v798
        %v803 = vpack.c.bf16 %v799, %v799
        %v804 = vpack.c.bf16 %v800, %v800
        %v805 = vld [vmem:[#allocation8] sm:$0xf]
        %v806 = vld [vmem:[#allocation8 + $0x4] sm:$0xf]
        %v807 = vld [vmem:[#allocation8 + $0x8] sm:$0xf]
        %v808 = vld [vmem:[#allocation8 + $0xc] sm:$0xf]
        %v809 = vld [vmem:[#allocation8 + $0x10] sm:$0xf]
        %v810 = vld [vmem:[#allocation8 + $0x14] sm:$0xf]
        %v811 = vld [vmem:[#allocation8 + $0x18] sm:$0xf]
        %v812 = vld [vmem:[#allocation8 + $0x1c] sm:$0xf]
        %v813 = vld [vmem:[#allocation8 + $0x20] sm:$0xf]
        %v814 = vld [vmem:[#allocation8 + $0x24] sm:$0xf]
        %v815 = vld [vmem:[#allocation8 + $0x28] sm:$0xf]
        %v816 = vld [vmem:[#allocation8 + $0x2c] sm:$0xf]
        %v817 = vld [vmem:[#allocation8 + $0x30] sm:$0xf]
        %v818 = vld [vmem:[#allocation8 + $0x34] sm:$0xf]
        %v819 = vld [vmem:[#allocation8 + $0x38] sm:$0xf]
        %v820 = vld [vmem:[#allocation8 + $0x3c] sm:$0xf]
        %v821 = vld [vmem:[#allocation8 + $0x40] sm:$0xf]
        %v822 = vld [vmem:[#allocation8 + $0x44] sm:$0xf]
        %v823 = vld [vmem:[#allocation8 + $0x48] sm:$0xf]
        %v824 = vld [vmem:[#allocation8 + $0x4c] sm:$0xf]
        %v825 = vld [vmem:[#allocation8 + $0x50] sm:$0xf]
        %v826 = vld [vmem:[#allocation8 + $0x54] sm:$0xf]
        %v827 = vld [vmem:[#allocation8 + $0x58] sm:$0xf]
        %v828 = vld [vmem:[#allocation8 + $0x5c] sm:$0xf]
        %v829 = vld [vmem:[#allocation8 + $0x60] sm:$0xf]
        %v830 = vld [vmem:[#allocation8 + $0x64] sm:$0xf]
        %v831 = vld [vmem:[#allocation8 + $0x68] sm:$0xf]
        %v832 = vld [vmem:[#allocation8 + $0x6c] sm:$0xf]
        %v833 = vld [vmem:[#allocation8 + $0x70] sm:$0xf]
        %v834 = vld [vmem:[#allocation8 + $0x74] sm:$0xf]
        %v835 = vld [vmem:[#allocation8 + $0x78] sm:$0xf]
        %v836 = vld [vmem:[#allocation8 + $0x7c] sm:$0xf]
        %v837 = vld [vmem:[#allocation8 + $0x80] sm:$0xf]
        %v838 = vld [vmem:[#allocation8 + $0x84] sm:$0xf]
        %v839 = vld [vmem:[#allocation8 + $0x88] sm:$0xf]
        %v840 = vld [vmem:[#allocation8 + $0x8c] sm:$0xf]
        %v841 = vld [vmem:[#allocation8 + $0x90] sm:$0xf]
        %v842 = vld [vmem:[#allocation8 + $0x94] sm:$0xf]
        %v843 = vld [vmem:[#allocation8 + $0x98] sm:$0xf]
        %v844 = vld [vmem:[#allocation8 + $0x9c] sm:$0xf]
        %v845 = vld [vmem:[#allocation8 + $0xa0] sm:$0xf]
        %v846 = vld [vmem:[#allocation8 + $0xa4] sm:$0xf]
        %v847 = vld [vmem:[#allocation8 + $0xa8] sm:$0xf]
        %v848 = vld [vmem:[#allocation8 + $0xac] sm:$0xf]
        %v849 = vld [vmem:[#allocation8 + $0xb0] sm:$0xf]
        %v850 = vld [vmem:[#allocation8 + $0xb4] sm:$0xf]
        %v851 = vld [vmem:[#allocation8 + $0xb8] sm:$0xf]
        %v852 = vld [vmem:[#allocation8 + $0xbc] sm:$0xf]
        %v853 = vld [vmem:[#allocation8 + $0xc0] sm:$0xf]
        %v854 = vld [vmem:[#allocation8 + $0xc4] sm:$0xf]
        %v855 = vld [vmem:[#allocation8 + $0xc8] sm:$0xf]
        %v856 = vld [vmem:[#allocation8 + $0xcc] sm:$0xf]
        %v857 = vld [vmem:[#allocation8 + $0xd0] sm:$0xf]
        %v858 = vld [vmem:[#allocation8 + $0xd4] sm:$0xf]
        %v859 = vld [vmem:[#allocation8 + $0xd8] sm:$0xf]
        %v860 = vld [vmem:[#allocation8 + $0xdc] sm:$0xf]
        %v861 = vld [vmem:[#allocation8 + $0xe0] sm:$0xf]
        %v862 = vld [vmem:[#allocation8 + $0xe4] sm:$0xf]
        %v863 = vld [vmem:[#allocation8 + $0xe8] sm:$0xf]
        %v864 = vld [vmem:[#allocation8 + $0xec] sm:$0xf]
        %v865 = vld [vmem:[#allocation8 + $0xf0] sm:$0xf]
        %v866 = vld [vmem:[#allocation8 + $0xf4] sm:$0xf]
        %v867 = vld [vmem:[#allocation8 + $0xf8] sm:$0xf]
        %v868 = vld [vmem:[#allocation8 + $0xfc] sm:$0xf]
        %v869 = vld [vmem:[%s4] sm:$0x1]
        %v871 = vperm.slane %v869, 0
        %v937 = vunpack.c.l.b16 %v805
        %v938 = vunpack.c.l.b16 %v806
        %v939 = vunpack.c.l.b16 %v807
        %v940 = vunpack.c.l.b16 %v808
        %v941 = vunpack.c.l.b16 %v809
        %v942 = vunpack.c.l.b16 %v810
        %v943 = vunpack.c.l.b16 %v811
        %v944 = vunpack.c.l.b16 %v812
        %v945 = vunpack.c.l.b16 %v813
        %v946 = vunpack.c.l.b16 %v814
        %v947 = vunpack.c.l.b16 %v815
        %v948 = vunpack.c.l.b16 %v816
        %v949 = vunpack.c.l.b16 %v817
        %v950 = vunpack.c.l.b16 %v818
        %v951 = vunpack.c.l.b16 %v819
        %v952 = vunpack.c.l.b16 %v820
        %v953 = vunpack.c.l.b16 %v821
        %v954 = vunpack.c.l.b16 %v822
        %v955 = vunpack.c.l.b16 %v823
        %v956 = vunpack.c.l.b16 %v824
        %v957 = vunpack.c.l.b16 %v825
        %v958 = vunpack.c.l.b16 %v826
        %v959 = vunpack.c.l.b16 %v827
        %v960 = vunpack.c.l.b16 %v828
        %v961 = vunpack.c.l.b16 %v829
        %v962 = vunpack.c.l.b16 %v830
        %v963 = vunpack.c.l.b16 %v831
        %v964 = vunpack.c.l.b16 %v832
        %v965 = vunpack.c.l.b16 %v833
        %v966 = vunpack.c.l.b16 %v834
        %v967 = vunpack.c.l.b16 %v835
        %v968 = vunpack.c.l.b16 %v836
        %v969 = vunpack.c.l.b16 %v837
        %v970 = vunpack.c.l.b16 %v838
        %v971 = vunpack.c.l.b16 %v839
        %v972 = vunpack.c.l.b16 %v840
        %v973 = vunpack.c.l.b16 %v841
        %v974 = vunpack.c.l.b16 %v842
        %v975 = vunpack.c.l.b16 %v843
        %v976 = vunpack.c.l.b16 %v844
        %v977 = vunpack.c.l.b16 %v845
        %v978 = vunpack.c.l.b16 %v846
        %v979 = vunpack.c.l.b16 %v847
        %v980 = vunpack.c.l.b16 %v848
        %v981 = vunpack.c.l.b16 %v849
        %v982 = vunpack.c.l.b16 %v850
        %v983 = vunpack.c.l.b16 %v851
        %v984 = vunpack.c.l.b16 %v852
        %v985 = vunpack.c.l.b16 %v853
        %v986 = vunpack.c.l.b16 %v854
        %v987 = vunpack.c.l.b16 %v855
        %v988 = vunpack.c.l.b16 %v856
        %v989 = vunpack.c.l.b16 %v857
        %v990 = vunpack.c.l.b16 %v858
        %v991 = vunpack.c.l.b16 %v859
        %v992 = vunpack.c.l.b16 %v860
        %v993 = vunpack.c.l.b16 %v861
        %v994 = vunpack.c.l.b16 %v862
        %v995 = vunpack.c.l.b16 %v863
        %v996 = vunpack.c.l.b16 %v864
        %v997 = vunpack.c.l.b16 %v865
        %v998 = vunpack.c.l.b16 %v866
        %v999 = vunpack.c.l.b16 %v867
        %v1000 = vunpack.c.l.b16 %v868
        %v1001 = vpack.c.b16 %v938, %v937
        %v1002 = vpack.c.b16 %v940, %v939
        %v1003 = vpack.c.b16 %v942, %v941
        %v1004 = vpack.c.b16 %v944, %v943
        %v1005 = vpack.c.b16 %v946, %v945
        %v1006 = vpack.c.b16 %v948, %v947
        %v1007 = vpack.c.b16 %v950, %v949
        %v1008 = vpack.c.b16 %v952, %v951
        %v1009 = vpack.c.b16 %v954, %v953
        %v1010 = vpack.c.b16 %v956, %v955
        %v1011 = vpack.c.b16 %v958, %v957
        %v1012 = vpack.c.b16 %v960, %v959
        %v1013 = vpack.c.b16 %v962, %v961
        %v1014 = vpack.c.b16 %v964, %v963
        %v1015 = vpack.c.b16 %v966, %v965
        %v1016 = vpack.c.b16 %v968, %v967
        %v1017 = vpack.c.b16 %v970, %v969
        %v1018 = vpack.c.b16 %v972, %v971
        %v1019 = vpack.c.b16 %v974, %v973
        %v1020 = vpack.c.b16 %v976, %v975
        %v1021 = vpack.c.b16 %v978, %v977
        %v1022 = vpack.c.b16 %v980, %v979
        %v1023 = vpack.c.b16 %v982, %v981
        %v1024 = vpack.c.b16 %v984, %v983
        %v1025 = vpack.c.b16 %v986, %v985
        %v1026 = vpack.c.b16 %v988, %v987
        %v1027 = vpack.c.b16 %v990, %v989
        %v1028 = vpack.c.b16 %v992, %v991
        %v1029 = vpack.c.b16 %v994, %v993
        %v1030 = vpack.c.b16 %v996, %v995
        %v1031 = vpack.c.b16 %v998, %v997
        %v1032 = vpack.c.b16 %v1000, %v999
        %1065 = vmatpush.bf16.msra.mxu0 %v1008
        %1066 = vmatpush.bf16.msra.mxu0 %v1007
        %1067 = vmatpush.bf16.msra.mxu0 %v1006
        %1068 = vmatpush.bf16.msra.mxu0 %v1005
        %1069 = vmatpush.bf16.msra.mxu0 %v1004
        %1070 = vmatpush.bf16.msra.mxu0 %v1003
        %1071 = vmatpush.bf16.msra.mxu0 %v1002
        %1072 = vmatpush.bf16.msra.mxu0 %v1001
        %1073 = vmatmul.bf16.gmra.mxu0 %v801
        %v1074 = vpop.f32.mrf.mxu0
        %v1075 = vadd.f32 %v871, %v1074
        %v1076 = vpop.f32.mrf.mxu0
        %1077 = vdwg.mxu0
        %1078 = vmatpush.bf16.msra.mxu0 %v1016
        %1079 = vmatpush.bf16.msra.mxu0 %v1015
        %1080 = vmatpush.bf16.msra.mxu0 %v1014
        %1081 = vmatpush.bf16.msra.mxu0 %v1013
        %1082 = vmatpush.bf16.msra.mxu0 %v1012
        %1083 = vmatpush.bf16.msra.mxu0 %v1011
        %1084 = vmatpush.bf16.msra.mxu0 %v1010
        %1085 = vmatpush.bf16.msra.mxu0 %v1009
        %1086 = vmatmul.bf16.gmra.mxu0 %v802
        %v1087 = vpop.f32.mrf.mxu0
        %v1088 = vadd.f32 %v1075, %v1087
        %v1089 = vpop.f32.mrf.mxu0
        %1090 = vdwg.mxu0
        %1091 = vmatpush.bf16.msra.mxu0 %v1024
        %1092 = vmatpush.bf16.msra.mxu0 %v1023
        %1093 = vmatpush.bf16.msra.mxu0 %v1022
        %1094 = vmatpush.bf16.msra.mxu0 %v1021
        %1095 = vmatpush.bf16.msra.mxu0 %v1020
        %1096 = vmatpush.bf16.msra.mxu0 %v1019
        %1097 = vmatpush.bf16.msra.mxu0 %v1018
        %1098 = vmatpush.bf16.msra.mxu0 %v1017
        %1099 = vmatmul.bf16.gmra.mxu0 %v803
        %v1100 = vpop.f32.mrf.mxu0
        %v1101 = vadd.f32 %v1088, %v1100
        %v1102 = vpop.f32.mrf.mxu0
        %1103 = vdwg.mxu0
        %1104 = vmatpush.bf16.msra.mxu0 %v1032
        %1105 = vmatpush.bf16.msra.mxu0 %v1031
        %1106 = vmatpush.bf16.msra.mxu0 %v1030
        %1107 = vmatpush.bf16.msra.mxu0 %v1029
        %1108 = vmatpush.bf16.msra.mxu0 %v1028
        %1109 = vmatpush.bf16.msra.mxu0 %v1027
        %1110 = vmatpush.bf16.msra.mxu0 %v1026
        %1111 = vmatpush.bf16.msra.mxu0 %v1025
        %1112 = vmatmul.bf16.gmra.mxu0 %v804
        %v1113 = vpop.f32.mrf.mxu0
        %v1114 = vadd.f32 %v1101, %v1113
        %v1115 = vpop.f32.mrf.mxu0
        %1116 = vdwg.mxu0
        %1117 = vst [vmem:[%s290] sm:$0xff] %v1114
        %s1118 = sand.u32 %s142, 1
        %s1119 = scalar_lea.sflag [#allocation4], %s1118
        %s1120 = sand.u32 %s142, 1
        %s1121 = smul.addr %s1120, 8
        %s1122 = scalar_lea.vmem [#allocation10], %s1121
        // Predicated region
        $region57: #{tpu_custom_call.1} parent=39 // pred_check
          %p1123 = pneg %p152
        $region58: #{tpu_custom_call.1} parent=39 // pred_check_branch
          %1125 = sbr.rel (%p1123) target = $region60
        $region59: #{tpu_custom_call.1} parent=39 // pred_region
          %1127 = vsyncadd %s1119, 0
          %s1128 = smul.addr %s24, 8
          %s1129 = scalar_lea.hbm %s5, %s1128
          %s1131 = sshll.u32 %s1122, 4
          %s1132 = int_to_ptr.vmem [resolvable:$true] %s1131
          %s1133 = sshll.u32 %s1129, 4
          %s1134 = int_to_ptr.hbm [resolvable:$true] %s1133
          %1136 = dma.vmem_to_hbm [thread:$0]  %s1132, 128, %s1134, %s1119
        $region60: #{tpu_custom_call.1} parent=39 // pred_fallthru
          _
      $region40: #{tpu_custom_call.1} parent=5 // pred_fallthru
        _
      %p1137 = scmp.le.s32.totalorder 2, %s19
      // Predicated region
      $region61: #{tpu_custom_call.1} parent=5 // pred_check
        %p1138 = pneg %p1137
      $region62: #{tpu_custom_call.1} parent=5 // pred_check_branch
        %1140 = sbr.rel (%p1138) target = $region64
      $region63: #{tpu_custom_call.1} parent=5 // pred_region
        %s1141 = ssub.s32 %s19, 2
        // Predicated region
        $region65: #{tpu_custom_call.1} parent=63 // pred_check
          %p1142 = pneg %p158
        $region66: #{tpu_custom_call.1} parent=63 // pred_check_branch
          %1144 = sbr.rel (%p1142) target = $region68
        $region67: #{tpu_custom_call.1} parent=63 // pred_region
          %s1145 = sand.u32 %s143, 1
          %s1146 = scalar_lea.sflag [#allocation4], %s1145
          %s1147 = sand.u32 %s143, 1
          %s1148 = smul.addr %s1147, 8
          %s1149 = scalar_lea.vmem [#allocation10], %s1148
          %1151 = dma.done %s1146, 128
        $region68: #{tpu_custom_call.1} parent=63 // pred_fallthru
          _
      $region64: #{tpu_custom_call.1} parent=5 // pred_fallthru
        _
    $region6: #{tpu_custom_call.1} parent=1 // loop_footer
      %s23 = sadd.s32 1, %s19
    $region7: #{tpu_custom_call.1} parent=1 // loop_footer_branch
      %18 = sbr.rel target = $region3
    $region8: #{tpu_custom_call.1} parent=1 // loop_exit
      _
    %1152 = vsyncpa [#allocation3], 1
    %s1153 = scalar_lea.sflag [#allocation3], 1
    %1154 = vsyncpa %s1153, 1
    %1155 = vsyncpa [#allocation6], 1
    %1156 = vsyncpa [#allocation9], 1
    %1157 = vsyncpa [#allocation4], 1
    %s1158 = scalar_lea.sflag [#allocation4], 1
    %1159 = vsyncpa %s1158, 1

</llo_original>
